<compile_context>
chip_gen: v5e
topology: v5e:2x2
jax: 0.10.0
libtpu: 0.0.40
codegen_flags: <defaults>
</compile_context>

<pallas_src>
import functools
import math

import jax
import jax.numpy as jnp
from jax.experimental import pallas as pl
from jax.experimental.pallas import tpu as pltpu

# Whole-array VMEM block (used only for the tiny fused pooler/classifier head).
_VMEM = pl.BlockSpec(memory_space=pltpu.MemorySpace.VMEM)

_HEAD_PAD = 128  # pad classifier output lanes to a full vreg width


def _pick_tile(dim, max_tile, align):
    """Largest divisor of `dim` that is <= max_tile and a multiple of `align`;
    full-extent blocks (dim itself) are always legal, so fall back to dim."""
    if dim <= max_tile:
        return dim
    t = (max_tile // align) * align
    while t >= align:
        if dim % t == 0:
            return t
        t -= align
    return dim


# --------------------------- tiled linear -----------------------------------

def _linear_kernel(act, x_ref, w_ref, b_ref, o_ref, acc_ref):
    k = pl.program_id(2)

    @pl.when(k == 0)
    def _():
        acc_ref[...] = jnp.zeros_like(acc_ref)

    # bf16 MXU inputs, f32 accumulation.
    acc_ref[...] += jnp.dot(
        x_ref[...].astype(jnp.bfloat16),
        w_ref[...].astype(jnp.bfloat16),
        preferred_element_type=jnp.float32)

    @pl.when(k == pl.num_programs(2) - 1)
    def _():
        y = acc_ref[...] + b_ref[...].astype(jnp.float32)
        if act == "relu":
            y = jnp.maximum(y, 0.0)
        elif act == "gelu":
            # TODO(synk): HF BERT uses exact (erf) GELU; tanh approximation is
            # used for a Mosaic-safe lowering (~1e-3 relative difference).
            y = jax.nn.gelu(y, approximate=True)
        elif act == "tanh":
            y = jnp.tanh(y)
        o_ref[...] = y.astype(o_ref.dtype)


def linear(x, w, b, act="none", tm_max=256, tn_max=512, tk_max=512):
    """y = act(x @ w + b); x:(M,K) f32, w:(K,N) bf16, b:(N,) f32 -> (M,N) f32."""
    M, K = x.shape
    _, N = w.shape
    tm = _pick_tile(M, tm_max, 8)
    tn = _pick_tile(N, tn_max, 128)
    tk = _pick_tile(K, tk_max, 128)
    grid = (M // tm, N // tn, K // tk)
    return pl.pallas_call(
        functools.partial(_linear_kernel, act),
        out_shape=jax.ShapeDtypeStruct((M, N), jnp.float32),
        grid_spec=pltpu.PrefetchScalarGridSpec(
            num_scalar_prefetch=0,
            grid=grid,
            in_specs=[
                pl.BlockSpec((tm, tk), lambda i, j, k: (i, k)),
                pl.BlockSpec((tk, tn), lambda i, j, k: (k, j)),
                pl.BlockSpec((1, tn), lambda i, j, k: (0, j)),
            ],
            out_specs=pl.BlockSpec((tm, tn), lambda i, j, k: (i, j)),
            scratch_shapes=[pltpu.VMEM((tm, tn), jnp.float32)],
        ),
        compiler_params=pltpu.CompilerParams(
            dimension_semantics=("parallel", "parallel", "arbitrary"),
            vmem_limit_bytes=48 * 1024 * 1024,
        ),
    )(x, w, b.reshape(1, N))


# --------------------------- layernorm (+ fused residual) -------------------

def _ln_core(x, g, b, eps):
    mu = jnp.mean(x, axis=-1, keepdims=True)
    var = jnp.mean(jnp.square(x - mu), axis=-1, keepdims=True)
    y = (x - mu) * jax.lax.rsqrt(var + eps)
    return y * g + b


def _ln_kernel(eps, x_ref, g_ref, b_ref, o_ref):
    x = x_ref[...].astype(jnp.float32)
    o_ref[...] = _ln_core(x, g_ref[...], b_ref[...], eps).astype(o_ref.dtype)


def _ln_res_kernel(eps, x_ref, r_ref, g_ref, b_ref, o_ref):
    x = x_ref[...].astype(jnp.float32) + r_ref[...].astype(jnp.float32)
    o_ref[...] = _ln_core(x, g_ref[...], b_ref[...], eps).astype(o_ref.dtype)


def layernorm(x, g, b, residual=None, eps=1e-12, tm_max=512):
    """LN(x [+ residual]) * g + b, gridded over rows."""
    M, H = x.shape
    tm = _pick_tile(M, tm_max, 8)
    row_spec = pl.BlockSpec((tm, H), lambda i: (i, 0))
    vec_spec = pl.BlockSpec((1, H), lambda i: (0, 0))
    g2, b2 = g.reshape(1, H), b.reshape(1, H)
    if residual is None:
        kernel = functools.partial(_ln_kernel, eps)
        operands = (x, g2, b2)
        in_specs = [row_spec, vec_spec, vec_spec]
    else:
        kernel = functools.partial(_ln_res_kernel, eps)
        operands = (x, residual, g2, b2)
        in_specs = [row_spec, row_spec, vec_spec, vec_spec]
    return pl.pallas_call(
        kernel,
        out_shape=jax.ShapeDtypeStruct((M, H), jnp.float32),
        grid_spec=pltpu.PrefetchScalarGridSpec(
            num_scalar_prefetch=0,
            grid=(M // tm,),
            in_specs=in_specs,
            out_specs=row_spec,
        ),
        compiler_params=pltpu.CompilerParams(
            dimension_semantics=("parallel",)),
    )(*operands)


# --------------------------- attention (per batch x head grid) --------------

def _attn_kernel(scale, q_ref, k_ref, v_ref, bias_ref, o_ref):
    # q/k/v blocks: (1, S, dH) sliced out of the fused QKV activation.
    q = q_ref[0].astype(jnp.bfloat16)
    k = k_ref[0].astype(jnp.bfloat16)
    v = v_ref[0].astype(jnp.bfloat16)
    # scores[s, t] = q[s] . k[t]   (contract dH; no explicit transpose)
    scores = jax.lax.dot_general(
        q, k, (((1,), (1,)), ((), ())),
        preferred_element_type=jnp.float32) * scale
    scores = scores + bias_ref[0]                       # (1, S) key-mask bias
    m = jnp.max(scores, axis=-1, keepdims=True)
    e = jnp.exp(scores - m)
    denom = jnp.sum(e, axis=-1, keepdims=True)
    probs = e * pl.reciprocal(denom, approx=True)       # EUP slot, ~free
    ctx = jnp.dot(probs.astype(jnp.bfloat16), v,
                  preferred_element_type=jnp.float32)
    o_ref[0] = ctx.astype(o_ref.dtype)


def attention(qkv, mask_bias, num_heads, head_dim, scale):
    """qkv: (B, S, 3H) f32 fused projection; mask_bias: (B, 1, S) f32.
    Returns context (B, S, H); head split/merge handled by BlockSpecs."""
    B, S, H3 = qkv.shape
    H = H3 // 3
    # TODO(synk): for long sequences this materializes one S x S score tile per
    # (batch, head) step; switch to flash-style KV blocking if S grows large.
    q_spec = pl.BlockSpec((1, S, head_dim), lambda b, h: (b, 0, h))
    k_spec = pl.BlockSpec((1, S, head_dim), lambda b, h: (b, 0, num_heads + h))
    v_spec = pl.BlockSpec((1, S, head_dim),
                          lambda b, h: (b, 0, 2 * num_heads + h))
    bias_spec = pl.BlockSpec((1, 1, S), lambda b, h: (b, 0, 0))
    return pl.pallas_call(
        functools.partial(_attn_kernel, scale),
        out_shape=jax.ShapeDtypeStruct((B, S, H), jnp.float32),
        grid_spec=pltpu.PrefetchScalarGridSpec(
            num_scalar_prefetch=0,
            grid=(B, num_heads),
            in_specs=[q_spec, k_spec, v_spec, bias_spec],
            out_specs=pl.BlockSpec((1, S, head_dim), lambda b, h: (b, 0, h)),
        ),
        compiler_params=pltpu.CompilerParams(
            dimension_semantics=("parallel", "parallel")),
    )(qkv, qkv, qkv, mask_bias)


# --------------------------- fused pooler + classifier head -----------------

def _head_kernel(x_ref, pw_ref, pb_ref, w1_ref, b1_ref, w2_ref, b2_ref, o_ref):
    x = x_ref[...].astype(jnp.bfloat16)
    pooled = jnp.tanh(
        jnp.dot(x, pw_ref[...], preferred_element_type=jnp.float32)
        + pb_ref[...])
    h = jnp.dot(pooled.astype(jnp.bfloat16), w1_ref[...],
                preferred_element_type=jnp.float32) + b1_ref[...]
    h = jnp.maximum(h, 0.0)
    logits = jnp.dot(h.astype(jnp.bfloat16), w2_ref[...],
                     preferred_element_type=jnp.float32) + b2_ref[...]
    o_ref[...] = logits.astype(o_ref.dtype)


def pooler_classifier(cls_tok, pool_w, pool_b, w1, b1, w2_pad, b2_pad,
                      num_labels):
    """tanh(cls @ pool_w + pool_b) -> relu-linear -> linear, one pallas_call.
    Output lanes are padded to a multiple of 128; sliced to num_labels here."""
    B, H = cls_tok.shape
    n_pad = w2_pad.shape[1]
    logits_p = pl.pallas_call(
        _head_kernel,
        out_shape=jax.ShapeDtypeStruct((B, n_pad), jnp.float32),
        in_specs=[_VMEM] * 7,
        out_specs=_VMEM,
    )(cls_tok, pool_w, pool_b.reshape(1, H),
      w1, b1.reshape(1, -1), w2_pad, b2_pad.reshape(1, n_pad))
    return logits_p[:, :num_labels]


# --------------------------- params & forward -------------------------------

def init_params(key, cfg):
    # TODO(synk): BertModel.from_pretrained loads a checkpoint; parameters are
    # initialized synthetically here (normal * 0.02).  Weights stored bf16.
    H, I = cfg["hidden"], cfg["intermediate"]

    def nrm(k, shape, dtype=jnp.bfloat16):
        return (jax.random.normal(k, shape, jnp.float32) * 0.02).astype(dtype)

    keys = jax.random.split(key, 8 + cfg["layers"])
    cls_w2 = jnp.zeros((256, _HEAD_PAD), jnp.bfloat16)
    cls_w2 = cls_w2.at[:, :cfg["num_labels"]].set(
        nrm(keys[5], (256, cfg["num_labels"])))
    params = {
        "word_emb": nrm(keys[0], (cfg["vocab"], H), jnp.float32),
        "pos_emb": nrm(keys[1], (cfg["max_pos"], H), jnp.float32),
        "type_emb": nrm(keys[2], (cfg["type_vocab"], H), jnp.float32),
        "emb_ln_g": jnp.ones((H,), jnp.float32),
        "emb_ln_b": jnp.zeros((H,), jnp.float32),
        "pool_w": nrm(keys[3], (H, H)),
        "pool_b": jnp.zeros((H,), jnp.float32),
        # classifier head: Linear(H, 256) -> ReLU -> Linear(256, num_labels)
        "cls_w1": nrm(keys[4], (H, 256)),
        "cls_b1": jnp.zeros((256,), jnp.float32),
        "cls_w2_p": cls_w2,
        "cls_b2_p": jnp.zeros((_HEAD_PAD,), jnp.float32),
        "layers": [],
    }
    for li in range(cfg["layers"]):
        lk = jax.random.split(keys[8 + li], 4)
        params["layers"].append({
            # fused Q|K|V projection
            "wqkv": nrm(lk[0], (H, 3 * H)),
            "bqkv": jnp.zeros((3 * H,), jnp.float32),
            "wo": nrm(lk[1], (H, H)), "bo": jnp.zeros((H,), jnp.float32),
            "ln1_g": jnp.ones((H,), jnp.float32),
            "ln1_b": jnp.zeros((H,), jnp.float32),
            "w1": nrm(lk[2], (H, I)), "b1": jnp.zeros((I,), jnp.float32),
            "w2": nrm(lk[3], (I, H)), "b2": jnp.zeros((H,), jnp.float32),
            "ln2_g": jnp.ones((H,), jnp.float32),
            "ln2_b": jnp.zeros((H,), jnp.float32),
        })
    return params


def multi_label_classifier_forward(params, input_ids, attention_mask, cfg):
    B, S = input_ids.shape
    H = cfg["hidden"]
    nH = cfg["heads"]
    dH = H // nH
    scale = 1.0 / math.sqrt(dH)

    # --- BERT embeddings (gathers kept in plain JAX; token_type_ids = 0) ---
    emb = (params["word_emb"][input_ids]
           + params["pos_emb"][jnp.arange(S)][None, :, :]
           + params["type_emb"][0][None, None, :]).astype(jnp.float32)
    x = layernorm(emb.reshape(B * S, H),
                  params["emb_ln_g"], params["emb_ln_b"])        # (B*S, H)

    # additive key-mask bias, broadcast per head inside the attention kernel
    mask_bias = ((1.0 - attention_mask.astype(jnp.float32))
                 * -1e9).reshape(B, 1, S)

    # --- BERT encoder layers (dropout omitted: inference semantics) ---
    for layer in params["layers"]:
        qkv = linear(x, layer["wqkv"], layer["bqkv"])            # (B*S, 3H)
        ctx = attention(qkv.reshape(B, S, 3 * H), mask_bias, nH, dH, scale)
        attn_out = linear(ctx.reshape(B * S, H), layer["wo"], layer["bo"])
        x1 = layernorm(attn_out, layer["ln1_g"], layer["ln1_b"], residual=x)
        ffn = linear(x1, layer["w1"], layer["b1"], act="gelu")
        ffn = linear(ffn, layer["w2"], layer["b2"])
        x = layernorm(ffn, layer["ln2_g"], layer["ln2_b"], residual=x1)

    # --- pooler (tanh Linear on [CLS]) + classifier head, fused ---
    cls_tok = x.reshape(B, S, H)[:, 0, :]                        # (B, H)
    logits = pooler_classifier(cls_tok, params["pool_w"], params["pool_b"],
                               params["cls_w1"], params["cls_b1"],
                               params["cls_w2_p"], params["cls_b2_p"],
                               cfg["num_labels"])
    return logits                                                # (B, labels)


# --------------------------- demo -------------------------------------------

if __name__ == "__main__":
    # hidden=256 / heads=2 keeps head_dim = 128 (lane-aligned attention blocks)
    cfg = dict(vocab=64, max_pos=32, type_vocab=2, hidden=256, layers=2,
               heads=2, intermediate=512, num_labels=8)

    root = jax.random.PRNGKey(0)
    k_params, k_ids = jax.random.split(root)
    params = init_params(k_params, cfg)

    B, S = 2, 8
    input_ids = jax.random.randint(k_ids, (B, S), 0, cfg["vocab"],
                                   dtype=jnp.int32)
    attention_mask = jnp.array([[1, 1, 1, 1, 1, 1, 1, 1],
                                [1, 1, 1, 1, 1, 1, 0, 0]], dtype=jnp.int32)

    logits = multi_label_classifier_forward(params, input_ids,
                                            attention_mask, cfg)
    jax.block_until_ready(logits)
    assert logits.shape == (B, cfg["num_labels"])
    print("KERNEL_OK")
</pallas_src>

<mosaic_0001>
module attributes {stable_mosaic.version = 11 : i64} {
  func.func @_ln_kernel(%arg0: i32, %arg1: memref<16x256xf32, #tpu.memory_space<vmem>>, %arg2: memref<1x256xf32, #tpu.memory_space<vmem>>, %arg3: memref<1x256xf32, #tpu.memory_space<vmem>>, %arg4: memref<16x256xf32, #tpu.memory_space<vmem>>) attributes {dimension_semantics = [#tpu.dimension_semantics<parallel>], iteration_bounds = array<i64: 1>, scalar_prefetch = 0 : i64, scratch_operands = 0 : i64, tpu.core_type = #tpu.core_type<tc>, window_params = [{transform_indices = @transform_0, window_bounds = array<i64: 16, 256>}, {pipeline_mode = #tpu.pipeline_mode<synchronous>, transform_indices = @transform_1, window_bounds = array<i64: 1, 256>}, {pipeline_mode = #tpu.pipeline_mode<synchronous>, transform_indices = @transform_2, window_bounds = array<i64: 1, 256>}, {transform_indices = @transform_3, window_bounds = array<i64: 16, 256>}]} {
    %c0 = arith.constant 0 : index
    %c0_0 = arith.constant 0 : index
    %0 = vector.load %arg1[%c0, %c0_0] : memref<16x256xf32, #tpu.memory_space<vmem>>, vector<16x256xf32>
    %c0_1 = arith.constant 0 : index
    %c0_2 = arith.constant 0 : index
    %1 = vector.load %arg2[%c0_1, %c0_2] : memref<1x256xf32, #tpu.memory_space<vmem>>, vector<1x256xf32>
    %c0_3 = arith.constant 0 : index
    %c0_4 = arith.constant 0 : index
    %2 = vector.load %arg3[%c0_3, %c0_4] : memref<1x256xf32, #tpu.memory_space<vmem>>, vector<1x256xf32>
    %cst = arith.constant dense<0.000000e+00> : vector<16xf32>
    %3 = vector.multi_reduction <add>, %0, %cst [1] : vector<16x256xf32> to vector<16xf32>
    %4 = vector.shape_cast %3 : vector<16xf32> to vector<16x1xf32>
    %cst_5 = arith.constant 2.560000e+02 : f32
    %5 = vector.broadcast %cst_5 : f32 to vector<16x1xf32>
    %6 = arith.divf %4, %5 : vector<16x1xf32>
    %7 = vector.broadcast %6 : vector<16x1xf32> to vector<16x256xf32>
    %8 = arith.subf %0, %7 : vector<16x256xf32>
    %9 = arith.mulf %8, %8 : vector<16x256xf32>
    %cst_6 = arith.constant dense<0.000000e+00> : vector<16xf32>
    %10 = vector.multi_reduction <add>, %9, %cst_6 [1] : vector<16x256xf32> to vector<16xf32>
    %11 = vector.shape_cast %10 : vector<16xf32> to vector<16x1xf32>
    %cst_7 = arith.constant 2.560000e+02 : f32
    %12 = vector.broadcast %cst_7 : f32 to vector<16x1xf32>
    %13 = arith.divf %11, %12 : vector<16x1xf32>
    %14 = vector.broadcast %6 : vector<16x1xf32> to vector<16x256xf32>
    %15 = arith.subf %0, %14 : vector<16x256xf32>
    %cst_8 = arith.constant 9.99999996E-13 : f32
    %16 = vector.broadcast %cst_8 : f32 to vector<16x1xf32>
    %17 = arith.addf %13, %16 : vector<16x1xf32>
    %18 = math.rsqrt %17 : vector<16x1xf32>
    %19 = vector.broadcast %18 : vector<16x1xf32> to vector<16x256xf32>
    %20 = arith.mulf %15, %19 : vector<16x256xf32>
    %21 = vector.broadcast %1 : vector<1x256xf32> to vector<16x256xf32>
    %22 = arith.mulf %20, %21 : vector<16x256xf32>
    %23 = vector.broadcast %2 : vector<1x256xf32> to vector<16x256xf32>
    %24 = arith.addf %22, %23 : vector<16x256xf32>
    %c0_9 = arith.constant 0 : index
    %c0_10 = arith.constant 0 : index
    %25 = vector.load %arg4[%c0_9, %c0_10] : memref<16x256xf32, #tpu.memory_space<vmem>>, vector<16x256xf32>
    tpu.vector_store %arg4[%c0_9, %c0_10], %24 {strides = array<i32>} : memref<16x256xf32, #tpu.memory_space<vmem>>, vector<16x256xf32>,
    return
  }
  func.func @transform_0(%arg0: i32) -> (i32, i32) {
    %c0_i32 = arith.constant 0 : i32
    %c0_i32_0 = arith.constant 0 : i32
    return %arg0, %c0_i32 : i32, i32
  }
  func.func @transform_1(%arg0: i32) -> (i32, i32) {
    %c0_i32 = arith.constant 0 : i32
    %c0_i32_0 = arith.constant 0 : i32
    %c0_i32_1 = arith.constant 0 : i32
    return %c0_i32, %c0_i32_0 : i32, i32
  }
  func.func @transform_2(%arg0: i32) -> (i32, i32) {
    %c0_i32 = arith.constant 0 : i32
    %c0_i32_0 = arith.constant 0 : i32
    %c0_i32_1 = arith.constant 0 : i32
    return %c0_i32, %c0_i32_0 : i32, i32
  }
  func.func @transform_3(%arg0: i32) -> (i32, i32) {
    %c0_i32 = arith.constant 0 : i32
    %c0_i32_0 = arith.constant 0 : i32
    return %arg0, %c0_i32 : i32, i32
  }
}

</mosaic_0001>

<llo_original>
// kernel: tpu_custom_call.1
$region0: #{tpu_custom_call.1}
  #allocation0 [shape = 'u32[]', space=smem, size = 0x4, offset = 0x4, fixed_abs, tag = 'smem constant byte address 0x4 - core index']
  #allocation1 [shape = 'u32[72,128]{1,0:T(1,128)}', space=vmem, size = 0x9000, scoped, tag = 'internal scratch']
  %s0 = inlined_call_operand.hbm [shape: f32[16,256], index: 0, kind: input, shape index: {}]
  %s1 = inlined_call_operand.hbm [shape: f32[1,256], index: 1, kind: input, shape index: {}]
  %s2 = inlined_call_operand.hbm [shape: f32[1,256], index: 2, kind: input, shape index: {}]
  %s3 = inlined_call_operand.hbm [shape: f32[16,256], index: 3, kind: output, shape index: {}]
  %s4 = sld [smem:[#allocation0]]
  $region34: #{tpu_custom_call.1} parent=0
    _
  %s6 = ssub.s32 1, %s4
  %s7 = scalar_select 0, %s6, %s4
  $region1: #{tpu_custom_call.1} parent=0
    #allocation2 [shape = 'u8[16384]{0}', space=vmem, size = 0x4000, scoped, tag = 'input window, operand 0, single buffered']
    #allocation3 [shape = 's32[1]{0}', space=sflag, size = 0x4, scoped, tag = 'scoped memory for tpu_custom_call.1']
    #allocation4 [shape = 's32[1]{0}', space=sflag, size = 0x4, scoped, tag = 'scoped memory for tpu_custom_call.1']
    #allocation5 [shape = 'u8[1024]{0}', space=vmem, size = 0x400, scoped, tag = 'input window, operand 1, single buffered']
    #allocation6 [shape = 's32[1]{0}', space=sflag, size = 0x4, scoped, tag = 'scoped memory for tpu_custom_call.1']
    #allocation7 [shape = 'u8[1024]{0}', space=vmem, size = 0x400, scoped, tag = 'input window, operand 2, single buffered']
    #allocation8 [shape = 'u8[16384]{0}', space=vmem, size = 0x4000, scoped, tag = 'output window, operand 0, single buffered']
    %8 = vsyncpa [#allocation3], 0
    %9 = vsyncpa [#allocation6], 0
    %10 = vsyncpa [#allocation4], 0
    // Predicated region
    $region2: #{tpu_custom_call.1} parent=1 // pred_check
      _
    $region3: #{tpu_custom_call.1} parent=1 // pred_check_branch
      %12 = sbr.rel (0) target = $region5
    $region4: #{tpu_custom_call.1} parent=1 // pred_region
      %14 = vsyncadd [#allocation3], 0
      %s15 = sshll.u32 %s0, 4
      %s16 = int_to_ptr.hbm [resolvable:$true] %s15
      %s17 = sshll.u32 [#allocation2], 4
      %s18 = int_to_ptr.vmem [resolvable:$true] %s17
      %23 = dma.hbm_to_vmem [thread:$0]  %s16, 512, %s18, [#allocation3], 256, 256, 16
    $region5: #{tpu_custom_call.1} parent=1 // pred_fallthru
      _
    // Predicated region
    $region6: #{tpu_custom_call.1} parent=1 // pred_check
      _
    $region7: #{tpu_custom_call.1} parent=1 // pred_check_branch
      %25 = sbr.rel (0) target = $region9
    $region8: #{tpu_custom_call.1} parent=1 // pred_region
      %27 = vsyncadd [#allocation6], 0
      %s29 = sshll.u32 %s1, 4
      %s30 = int_to_ptr.hbm [resolvable:$true] %s29
      %s31 = sshll.u32 [#allocation5], 4
      %s32 = int_to_ptr.vmem [resolvable:$true] %s31
      %34 = dma.hbm_to_vmem [thread:$0]  %s30, 32, %s32, [#allocation6]
    $region9: #{tpu_custom_call.1} parent=1 // pred_fallthru
      _
    // Predicated region
    $region10: #{tpu_custom_call.1} parent=1 // pred_check
      _
    $region11: #{tpu_custom_call.1} parent=1 // pred_check_branch
      %36 = sbr.rel (0) target = $region13
    $region12: #{tpu_custom_call.1} parent=1 // pred_region
      %38 = vsyncadd [#allocation6], 0
      %s40 = sshll.u32 %s2, 4
      %s41 = int_to_ptr.hbm [resolvable:$true] %s40
      %s42 = sshll.u32 [#allocation7], 4
      %s43 = int_to_ptr.vmem [resolvable:$true] %s42
      %45 = dma.hbm_to_vmem [thread:$0]  %s41, 32, %s43, [#allocation6]
    $region13: #{tpu_custom_call.1} parent=1 // pred_fallthru
      _
    // Predicated region
    $region14: #{tpu_custom_call.1} parent=1 // pred_check
      _
    $region15: #{tpu_custom_call.1} parent=1 // pred_check_branch
      %47 = sbr.rel (0) target = $region17
    $region16: #{tpu_custom_call.1} parent=1 // pred_region
      %49 = dma.done [#allocation3], 512
    $region17: #{tpu_custom_call.1} parent=1 // pred_fallthru
      _
    // Predicated region
    $region18: #{tpu_custom_call.1} parent=1 // pred_check
      _
    $region19: #{tpu_custom_call.1} parent=1 // pred_check_branch
      %51 = sbr.rel (0) target = $region21
    $region20: #{tpu_custom_call.1} parent=1 // pred_region
      %53 = dma.done [#allocation6], 32
    $region21: #{tpu_custom_call.1} parent=1 // pred_fallthru
      _
    // Predicated region
    $region22: #{tpu_custom_call.1} parent=1 // pred_check
      _
    $region23: #{tpu_custom_call.1} parent=1 // pred_check_branch
      %55 = sbr.rel (0) target = $region25
    $region24: #{tpu_custom_call.1} parent=1 // pred_region
      %57 = dma.done [#allocation6], 32
    $region25: #{tpu_custom_call.1} parent=1 // pred_fallthru
      _
    %v58 = vld [vmem:[#allocation2] sm:$0xff]
    %v59 = vld [vmem:[#allocation2 + $0x8] sm:$0xff]
    %v60 = vld [vmem:[#allocation2 + $0x10] sm:$0xff]
    %v61 = vld [vmem:[#allocation2 + $0x18] sm:$0xff]
    %v62 = vld [vmem:[#allocation5] sm:$0x3]
    %v63 = vld [vmem:[#allocation7] sm:$0x3]
    %v64 = vadd.f32 %v58, %v59
    %65 = vadd.xlane.f32.xlu0 %v64
    %v66 = vpop.xlane.xlu0 %65
    %v67 = vadd.f32 %v60, %v61
    %68 = vadd.xlane.f32.xlu0 %v67
    %v69 = vpop.xlane.xlu0 %68
    %v70 = vrcp.pop 256.0
    %v71 = vmul.f32 256.0, %v70
    %v72 = vsub.f32 1.0, %v71
    %v73 = vmul.f32 %v70, %v72
    %v74 = vadd.f32 %v70, %v73
    %vm75 = vweird.f32 %v70
    %v76 = vsel %vm75, %v70, %v74
    %v77 = vmul.f32 %v66, %v76
    %v78 = vmul.f32 %v69, %v76
    %v79 = vsub.f32 %v58, %v77
    %v80 = vsub.f32 %v59, %v77
    %v81 = vsub.f32 %v60, %v78
    %v82 = vsub.f32 %v61, %v78
    %v83 = vmul.f32 %v79, %v79
    %v84 = vmul.f32 %v80, %v80
    %v85 = vmul.f32 %v81, %v81
    %v86 = vmul.f32 %v82, %v82
    %v87 = vadd.f32 %v83, %v84
    %88 = vadd.xlane.f32.xlu0 %v87
    %v89 = vpop.xlane.xlu0 %88
    %v90 = vadd.f32 %v85, %v86
    %91 = vadd.xlane.f32.xlu0 %v90
    %v92 = vpop.xlane.xlu0 %91
    %v93 = vmul.f32 %v89, %v76
    %v94 = vmul.f32 %v92, %v76
    %v95 = vadd.f32 %v93, 1e-12
    %v96 = vadd.f32 %v94, 1e-12
    %v97 = vrsqrt.pop %v95
    %v98 = vmul.f32 %v97, %v95
    %v99 = vmul.f32 %v98, %v97
    %v100 = vmul.f32 0.5, %v99
    %v101 = vsub.f32 1.5, %v100
    %v102 = vmul.f32 %v97, %v101
    %vm103 = vweird.f32 %v95
    %vm104 = vweird.f32 %v97
    %vm105 = vmor %vm103, %vm104
    %v106 = vsel %vm105, %v97, %v102
    %v107 = vrsqrt.pop %v96
    %v108 = vmul.f32 %v107, %v96
    %v109 = vmul.f32 %v108, %v107
    %v110 = vmul.f32 0.5, %v109
    %v111 = vsub.f32 1.5, %v110
    %v112 = vmul.f32 %v107, %v111
    %vm113 = vweird.f32 %v96
    %vm114 = vweird.f32 %v107
    %vm115 = vmor %vm113, %vm114
    %v116 = vsel %vm115, %v107, %v112
    %v117 = vmul.f32 %v79, %v106
    %v118 = vmul.f32 %v80, %v106
    %v119 = vmul.f32 %v81, %v116
    %v120 = vmul.f32 %v82, %v116
    %v122 = vperm.slane %v62, 0
    %v123 = vperm.slane %v62, 1
    %v126 = vmul.f32 %v117, %v122
    %v127 = vmul.f32 %v118, %v123
    %v128 = vmul.f32 %v119, %v122
    %v129 = vmul.f32 %v120, %v123
    %v131 = vperm.slane %v63, 0
    %v132 = vperm.slane %v63, 1
    %v135 = vadd.f32 %v126, %v131
    %v136 = vadd.f32 %v127, %v132
    %v137 = vadd.f32 %v128, %v131
    %v138 = vadd.f32 %v129, %v132
    %139 = vst [vmem:[#allocation8] sm:$0xff] %v135
    %140 = vst [vmem:[#allocation8 + $0x8] sm:$0xff] %v136
    %141 = vst [vmem:[#allocation8 + $0x10] sm:$0xff] %v137
    %142 = vst [vmem:[#allocation8 + $0x18] sm:$0xff] %v138
    // Predicated region
    $region26: #{tpu_custom_call.1} parent=1 // pred_check
      _
    $region27: #{tpu_custom_call.1} parent=1 // pred_check_branch
      %144 = sbr.rel (0) target = $region29
    $region28: #{tpu_custom_call.1} parent=1 // pred_region
      %146 = vsyncadd [#allocation4], 0
      %s147 = sshll.u32 [#allocation8], 4
      %s148 = int_to_ptr.vmem [resolvable:$true] %s147
      %s149 = sshll.u32 %s3, 4
      %s150 = int_to_ptr.hbm [resolvable:$true] %s149
      %155 = dma.vmem_to_hbm [thread:$0]  %s148, 512, %s150, [#allocation4], 256, 256, 16
    $region29: #{tpu_custom_call.1} parent=1 // pred_fallthru
      _
    // Predicated region
    $region30: #{tpu_custom_call.1} parent=1 // pred_check
      _
    $region31: #{tpu_custom_call.1} parent=1 // pred_check_branch
      %157 = sbr.rel (0) target = $region33
    $region32: #{tpu_custom_call.1} parent=1 // pred_region
      %159 = dma.done [#allocation4], 512
    $region33: #{tpu_custom_call.1} parent=1 // pred_fallthru
      _
    %160 = vsyncpa [#allocation3], 1
    %161 = vsyncpa [#allocation6], 1
    %162 = vsyncpa [#allocation4], 1

</llo_original>
